<compile_context>
chip_gen: v7x
topology: tpu7x:2x2x1
jax: 0.10.0
libtpu: 0.0.40
codegen_flags: <defaults>
</compile_context>

<pallas_src>
import functools

import jax
import jax.numpy as jnp
import numpy as np
from jax.experimental import pallas as pl
from jax.experimental.pallas import tpu as pltpu


# ----------------------------------------------------------------------------
# Fused, layer-skewed 2-layer LSTM kernel (single pallas_call, all in VMEM)
# ----------------------------------------------------------------------------
def _lstm_fused_kernel(x2d_ref, wih0_ref, b0_ref, wskew_ref, b1_ref, out_ref,
                       *, hidden, seq_len, batch):
    H, T, B = hidden, seq_len, batch
    f32 = jnp.float32
    bf16 = jnp.bfloat16

    # ---- one-time prolog (independent of the recurrent state) --------------
    # Layer-0 input projection for ALL timesteps as one MXU matmul (M = T*B).
    x2d = x2d_ref[...]                                   # (T*B, I) f32, time-major
    xw0 = jnp.dot(x2d.astype(bf16), wih0_ref[...],
                  preferred_element_type=f32) + b0_ref[...]          # (T*B, 4H)
    # Per-step additive slab for the fused 8H gate tile:
    #   lanes [0, 4H)  = xw0(t)  (x-projection + folded layer-0 biases)
    #   lanes [4H, 8H) = b1      (folded layer-1 biases, identical every step)
    b1_b = jnp.broadcast_to(b1_ref[...], (T * B, 4 * H))
    xwb = jnp.concatenate([xw0, b1_b], axis=1)            # (T*B, 8H)

    wskew = wskew_ref[...]                                # (2H, 8H) bf16

    def lstm_update(i, f, gg, o, c_prev):
        c = f * c_prev + i * gg
        h = o * jnp.tanh(c)
        return h, c

    zeros = jnp.zeros((B, H), f32)

    # ---- skewed recurrence --------------------------------------------------
    # Step 0: layer 0, timestep 0 only.  h0(-1) = 0  =>  gates are just xw0(0).
    g0 = xwb[0:B, 0:4 * H]
    sig = jax.nn.sigmoid(g0)
    th = jnp.tanh(g0)
    h0, c0 = lstm_update(sig[:, 0:H], sig[:, H:2 * H],
                         th[:, 2 * H:3 * H], sig[:, 3 * H:4 * H], zeros)
    h1, c1 = zeros, zeros                                 # layer-1 state at "t = -1"

    # Steps s = 1..T-1: layer 0 @ t=s and layer 1 @ t=s-1 with ONE matmul.
    # Step s = T: epilogue, layer 1 @ t=T-1 only.
    for s in range(1, T + 1):
        inp = jnp.concatenate([h0, h1], axis=1).astype(bf16)          # (B, 2H)
        g = jnp.dot(inp, wskew, preferred_element_type=f32)           # (B, 8H)
        if s < T:
            g = g + xwb[s * B:(s + 1) * B, :]
            # One sigmoid + one tanh dispatch over the full 256-lane slab.
            sig = jax.nn.sigmoid(g)
            th = jnp.tanh(g)
            h0, c0 = lstm_update(sig[:, 0:H], sig[:, H:2 * H],
                                 th[:, 2 * H:3 * H], sig[:, 3 * H:4 * H], c0)
            h1, c1 = lstm_update(sig[:, 4 * H:5 * H], sig[:, 5 * H:6 * H],
                                 th[:, 6 * H:7 * H], sig[:, 7 * H:8 * H], c1)
        else:
            # Epilogue: only layer-1 timestep T-1 remains.
            g1 = g[:, 4 * H:8 * H] + xwb[0:B, 4 * H:8 * H]            # lower half == b1
            sig = jax.nn.sigmoid(g1)
            th = jnp.tanh(g1)
            h1, c1 = lstm_update(sig[:, 0:H], sig[:, H:2 * H],
                                 th[:, 2 * H:3 * H], sig[:, 3 * H:4 * H], c1)

    out_ref[...] = h1.astype(out_ref.dtype)               # r_out[:, -1, :]


# ----------------------------------------------------------------------------
# One-time weight packing (outside the per-call path)
# ----------------------------------------------------------------------------
def pack_lstm_params(raw):
    """Gate-major (in, 4H) layout, folded biases, block-diagonal skewed weight, bf16."""
    wih0 = jnp.asarray(raw["weight_ih_l0"].T, jnp.bfloat16)            # (I, 4H)
    b0 = (raw["bias_ih_l0"] + raw["bias_hh_l0"]).reshape(1, -1).astype(jnp.float32)

    whh0_t = raw["weight_hh_l0"].T                                     # (H, 4H)
    wih1_t = raw["weight_ih_l1"].T                                     # (H, 4H)
    whh1_t = raw["weight_hh_l1"].T                                     # (H, 4H)
    # [h0(t-1), h1(t-2)] @ W_skew = [ h0@whh0 | h0@wih1 + h1@whh1 ]
    top = jnp.concatenate([whh0_t, wih1_t], axis=1)                    # (H, 8H)
    bot = jnp.concatenate([jnp.zeros_like(whh1_t), whh1_t], axis=1)    # (H, 8H)
    wskew = jnp.concatenate([top, bot], axis=0).astype(jnp.bfloat16)   # (2H, 8H)

    b1 = (raw["bias_ih_l1"] + raw["bias_hh_l1"]).reshape(1, -1).astype(jnp.float32)
    return {"wih0": wih0, "b0": b0, "wskew": wskew, "b1": b1}


@functools.partial(jax.jit, static_argnames=("hidden",))
def rnn_forward(packed, x, *, hidden):
    """x: (B, T, input_size), batch_first.  Returns r_out[:, -1, :] of shape (B, hidden)."""
    B, T, I = x.shape
    # Time-major 2D view of the input (pure relayout, done by XLA outside the kernel).
    x2d = jnp.transpose(x, (1, 0, 2)).reshape(T * B, I)
    kernel = functools.partial(_lstm_fused_kernel, hidden=hidden, seq_len=T, batch=B)
    vmem = pl.BlockSpec(memory_space=pltpu.MemorySpace.VMEM)
    return pl.pallas_call(
        kernel,
        out_shape=jax.ShapeDtypeStruct((B, hidden), jnp.float32),
        in_specs=[vmem] * 5,
        out_specs=vmem,
    )(x2d, packed["wih0"], packed["b0"], packed["wskew"], packed["b1"])


# ----------------------------------------------------------------------------
# Parameter init (PyTorch nn.LSTM default: U(-1/sqrt(H), 1/sqrt(H)))
# ----------------------------------------------------------------------------
def init_lstm_params(key, input_size, hidden_size):
    k = 1.0 / float(np.sqrt(hidden_size))
    shapes = {
        "weight_ih_l0": (4 * hidden_size, input_size),
        "weight_hh_l0": (4 * hidden_size, hidden_size),
        "bias_ih_l0": (4 * hidden_size,),
        "bias_hh_l0": (4 * hidden_size,),
        "weight_ih_l1": (4 * hidden_size, hidden_size),
        "weight_hh_l1": (4 * hidden_size, hidden_size),
        "bias_ih_l1": (4 * hidden_size,),
        "bias_hh_l1": (4 * hidden_size,),
    }
    keys = jax.random.split(key, len(shapes))
    return {name: jax.random.uniform(kk, shape, jnp.float32, -k, k)
            for kk, (name, shape) in zip(keys, shapes.items())}


# ----------------------------------------------------------------------------
# Pure-JAX f32 reference (for correctness check)
# ----------------------------------------------------------------------------
def rnn_forward_ref(raw, x, hidden):
    B, T, _ = x.shape

    def cell(x_t, h_prev, c_prev, w_ih, w_hh, b_ih, b_hh):
        g = x_t @ w_ih.T + b_ih + h_prev @ w_hh.T + b_hh
        i, f, gg, o = jnp.split(g, 4, axis=-1)
        c = jax.nn.sigmoid(f) * c_prev + jax.nn.sigmoid(i) * jnp.tanh(gg)
        h = jax.nn.sigmoid(o) * jnp.tanh(c)
        return h, c

    h0 = c0 = h1 = c1 = jnp.zeros((B, hidden), jnp.float32)
    for t in range(T):
        h0, c0 = cell(x[:, t, :], h0, c0, raw["weight_ih_l0"], raw["weight_hh_l0"],
                      raw["bias_ih_l0"], raw["bias_hh_l0"])
        h1, c1 = cell(h0, h1, c1, raw["weight_ih_l1"], raw["weight_hh_l1"],
                      raw["bias_ih_l1"], raw["bias_hh_l1"])
    return h1


if __name__ == "__main__":
    input_size, hidden_size = 32, 32     # 4H = 128, 8H = 256 -> lane-aligned gate slabs
    batch, seq = 2, 8

    key = jax.random.PRNGKey(0)
    k_param, k_x = jax.random.split(key)
    raw = init_lstm_params(k_param, input_size, hidden_size)
    packed = pack_lstm_params(raw)
    x = jax.random.normal(k_x, (batch, seq, input_size), jnp.float32)

    out = rnn_forward(packed, x, hidden=hidden_size)
    jax.block_until_ready(out)
    assert out.shape == (batch, hidden_size)

    # bf16 MXU (incl. bf16-cast recurrent h) vs f32 reference -> loose tolerance.
    ref = rnn_forward_ref(raw, x, hidden_size)
    np.testing.assert_allclose(np.asarray(out), np.asarray(ref), atol=5e-2, rtol=0)

    print("KERNEL_OK")
</pallas_src>

<mosaic_0001>
module attributes {stable_mosaic.version = 11 : i64} {
  func.func @_lstm_fused_kernel(%arg0: memref<16x32xf32, #tpu.memory_space<vmem>>, %arg1: memref<32x128xbf16, #tpu.memory_space<vmem>>, %arg2: memref<1x128xf32, #tpu.memory_space<vmem>>, %arg3: memref<64x256xbf16, #tpu.memory_space<vmem>>, %arg4: memref<1x128xf32, #tpu.memory_space<vmem>>, %arg5: memref<2x32xf32, #tpu.memory_space<vmem>>) attributes {dimension_semantics = [], scalar_prefetch = 0 : i64, scratch_operands = 0 : i64, tpu.core_type = #tpu.core_type<tc>} {
    %c0 = arith.constant 0 : index
    %c0_0 = arith.constant 0 : index
    %0 = vector.load %arg0[%c0, %c0_0] : memref<16x32xf32, #tpu.memory_space<vmem>>, vector<16x32xf32>
    %1 = arith.truncf %0 : vector<16x32xf32> to vector<16x32xbf16>
    %c0_1 = arith.constant 0 : index
    %c0_2 = arith.constant 0 : index
    %2 = vector.load %arg1[%c0_1, %c0_2] : memref<32x128xbf16, #tpu.memory_space<vmem>>, vector<32x128xbf16>
    %cst = arith.constant dense<0.000000e+00> : vector<16x128xf32>
    %3 = tpu.matmul %1, %2, %cst {dimension_numbers = #tpu.dot_dimension_numbers<[1], [0], [0], [1], [0, 0, 1, 1], [], []>} : vector<16x32xbf16>, vector<32x128xbf16>, vector<16x128xf32> -> vector<16x128xf32>
    %c0_3 = arith.constant 0 : index
    %c0_4 = arith.constant 0 : index
    %4 = vector.load %arg2[%c0_3, %c0_4] : memref<1x128xf32, #tpu.memory_space<vmem>>, vector<1x128xf32>
    %5 = vector.broadcast %4 : vector<1x128xf32> to vector<16x128xf32>
    %6 = arith.addf %3, %5 : vector<16x128xf32>
    %c0_5 = arith.constant 0 : index
    %c0_6 = arith.constant 0 : index
    %7 = vector.load %arg4[%c0_5, %c0_6] : memref<1x128xf32, #tpu.memory_space<vmem>>, vector<1x128xf32>
    %8 = vector.shape_cast %7 : vector<1x128xf32> to vector<1x128xf32>
    %9 = vector.broadcast %8 : vector<1x128xf32> to vector<16x128xf32>
    %10 = tpu.concatenate %6, %9 in 1 : vector<16x128xf32>, vector<16x128xf32> -> vector<16x256xf32>
    %c0_7 = arith.constant 0 : index
    %c0_8 = arith.constant 0 : index
    %11 = vector.load %arg3[%c0_7, %c0_8] : memref<64x256xbf16, #tpu.memory_space<vmem>>, vector<64x256xbf16>
    %cst_9 = arith.constant 0.000000e+00 : f32
    %12 = vector.broadcast %cst_9 : f32 to vector<2x32xf32>
    %13 = vector.extract_strided_slice %10 {offsets = [0, 0], sizes = [2, 128], strides = [1, 1]} : vector<16x256xf32> to vector<2x128xf32>
    %14 = arith.negf %13 : vector<2x128xf32>
    %15 = math.exp %14 : vector<2x128xf32>
    %cst_10 = arith.constant 1.000000e+00 : f32
    %16 = vector.broadcast %cst_10 : f32 to vector<2x128xf32>
    %17 = arith.addf %16, %15 : vector<2x128xf32>
    %18 = arith.divf %16, %17 : vector<2x128xf32>
    %19 = math.tanh %13 : vector<2x128xf32>
    %20 = vector.extract_strided_slice %18 {offsets = [0, 0], sizes = [2, 32], strides = [1, 1]} : vector<2x128xf32> to vector<2x32xf32>
    %21 = vector.extract_strided_slice %18 {offsets = [0, 32], sizes = [2, 32], strides = [1, 1]} : vector<2x128xf32> to vector<2x32xf32>
    %22 = vector.extract_strided_slice %19 {offsets = [0, 64], sizes = [2, 32], strides = [1, 1]} : vector<2x128xf32> to vector<2x32xf32>
    %23 = vector.extract_strided_slice %18 {offsets = [0, 96], sizes = [2, 32], strides = [1, 1]} : vector<2x128xf32> to vector<2x32xf32>
    %24 = arith.mulf %21, %12 : vector<2x32xf32>
    %25 = arith.mulf %20, %22 : vector<2x32xf32>
    %26 = arith.addf %24, %25 : vector<2x32xf32>
    %27 = math.tanh %26 : vector<2x32xf32>
    %28 = arith.mulf %23, %27 : vector<2x32xf32>
    %29 = tpu.concatenate %28, %12 in 1 : vector<2x32xf32>, vector<2x32xf32> -> vector<2x64xf32>
    %30 = arith.truncf %29 : vector<2x64xf32> to vector<2x64xbf16>
    %cst_11 = arith.constant dense<0.000000e+00> : vector<2x256xf32>
    %31 = tpu.matmul %30, %11, %cst_11 {dimension_numbers = #tpu.dot_dimension_numbers<[1], [0], [0], [1], [0, 0, 1, 1], [], []>} : vector<2x64xbf16>, vector<64x256xbf16>, vector<2x256xf32> -> vector<2x256xf32>
    %32 = vector.extract_strided_slice %10 {offsets = [2, 0], sizes = [2, 256], strides = [1, 1]} : vector<16x256xf32> to vector<2x256xf32>
    %33 = arith.addf %31, %32 : vector<2x256xf32>
    %34 = arith.negf %33 : vector<2x256xf32>
    %35 = math.exp %34 : vector<2x256xf32>
    %cst_12 = arith.constant 1.000000e+00 : f32
    %36 = vector.broadcast %cst_12 : f32 to vector<2x256xf32>
    %37 = arith.addf %36, %35 : vector<2x256xf32>
    %38 = arith.divf %36, %37 : vector<2x256xf32>
    %39 = math.tanh %33 : vector<2x256xf32>
    %40 = vector.extract_strided_slice %38 {offsets = [0, 0], sizes = [2, 32], strides = [1, 1]} : vector<2x256xf32> to vector<2x32xf32>
    %41 = vector.extract_strided_slice %38 {offsets = [0, 32], sizes = [2, 32], strides = [1, 1]} : vector<2x256xf32> to vector<2x32xf32>
    %42 = vector.extract_strided_slice %39 {offsets = [0, 64], sizes = [2, 32], strides = [1, 1]} : vector<2x256xf32> to vector<2x32xf32>
    %43 = vector.extract_strided_slice %38 {offsets = [0, 96], sizes = [2, 32], strides = [1, 1]} : vector<2x256xf32> to vector<2x32xf32>
    %44 = arith.mulf %41, %26 : vector<2x32xf32>
    %45 = arith.mulf %40, %42 : vector<2x32xf32>
    %46 = arith.addf %44, %45 : vector<2x32xf32>
    %47 = math.tanh %46 : vector<2x32xf32>
    %48 = arith.mulf %43, %47 : vector<2x32xf32>
    %49 = vector.extract_strided_slice %38 {offsets = [0, 128], sizes = [2, 32], strides = [1, 1]} : vector<2x256xf32> to vector<2x32xf32>
    %50 = vector.extract_strided_slice %38 {offsets = [0, 160], sizes = [2, 32], strides = [1, 1]} : vector<2x256xf32> to vector<2x32xf32>
    %51 = vector.extract_strided_slice %39 {offsets = [0, 192], sizes = [2, 32], strides = [1, 1]} : vector<2x256xf32> to vector<2x32xf32>
    %52 = vector.extract_strided_slice %38 {offsets = [0, 224], sizes = [2, 32], strides = [1, 1]} : vector<2x256xf32> to vector<2x32xf32>
    %53 = arith.mulf %50, %12 : vector<2x32xf32>
    %54 = arith.mulf %49, %51 : vector<2x32xf32>
    %55 = arith.addf %53, %54 : vector<2x32xf32>
    %56 = math.tanh %55 : vector<2x32xf32>
    %57 = arith.mulf %52, %56 : vector<2x32xf32>
    %58 = tpu.concatenate %48, %57 in 1 : vector<2x32xf32>, vector<2x32xf32> -> vector<2x64xf32>
    %59 = arith.truncf %58 : vector<2x64xf32> to vector<2x64xbf16>
    %cst_13 = arith.constant dense<0.000000e+00> : vector<2x256xf32>
    %60 = tpu.matmul %59, %11, %cst_13 {dimension_numbers = #tpu.dot_dimension_numbers<[1], [0], [0], [1], [0, 0, 1, 1], [], []>} : vector<2x64xbf16>, vector<64x256xbf16>, vector<2x256xf32> -> vector<2x256xf32>
    %61 = vector.extract_strided_slice %10 {offsets = [4, 0], sizes = [2, 256], strides = [1, 1]} : vector<16x256xf32> to vector<2x256xf32>
    %62 = arith.addf %60, %61 : vector<2x256xf32>
    %63 = arith.negf %62 : vector<2x256xf32>
    %64 = math.exp %63 : vector<2x256xf32>
    %cst_14 = arith.constant 1.000000e+00 : f32
    %65 = vector.broadcast %cst_14 : f32 to vector<2x256xf32>
    %66 = arith.addf %65, %64 : vector<2x256xf32>
    %67 = arith.divf %65, %66 : vector<2x256xf32>
    %68 = math.tanh %62 : vector<2x256xf32>
    %69 = vector.extract_strided_slice %67 {offsets = [0, 0], sizes = [2, 32], strides = [1, 1]} : vector<2x256xf32> to vector<2x32xf32>
    %70 = vector.extract_strided_slice %67 {offsets = [0, 32], sizes = [2, 32], strides = [1, 1]} : vector<2x256xf32> to vector<2x32xf32>
    %71 = vector.extract_strided_slice %68 {offsets = [0, 64], sizes = [2, 32], strides = [1, 1]} : vector<2x256xf32> to vector<2x32xf32>
    %72 = vector.extract_strided_slice %67 {offsets = [0, 96], sizes = [2, 32], strides = [1, 1]} : vector<2x256xf32> to vector<2x32xf32>
    %73 = arith.mulf %70, %46 : vector<2x32xf32>
    %74 = arith.mulf %69, %71 : vector<2x32xf32>
    %75 = arith.addf %73, %74 : vector<2x32xf32>
    %76 = math.tanh %75 : vector<2x32xf32>
    %77 = arith.mulf %72, %76 : vector<2x32xf32>
    %78 = vector.extract_strided_slice %67 {offsets = [0, 128], sizes = [2, 32], strides = [1, 1]} : vector<2x256xf32> to vector<2x32xf32>
    %79 = vector.extract_strided_slice %67 {offsets = [0, 160], sizes = [2, 32], strides = [1, 1]} : vector<2x256xf32> to vector<2x32xf32>
    %80 = vector.extract_strided_slice %68 {offsets = [0, 192], sizes = [2, 32], strides = [1, 1]} : vector<2x256xf32> to vector<2x32xf32>
    %81 = vector.extract_strided_slice %67 {offsets = [0, 224], sizes = [2, 32], strides = [1, 1]} : vector<2x256xf32> to vector<2x32xf32>
    %82 = arith.mulf %79, %55 : vector<2x32xf32>
    %83 = arith.mulf %78, %80 : vector<2x32xf32>
    %84 = arith.addf %82, %83 : vector<2x32xf32>
    %85 = math.tanh %84 : vector<2x32xf32>
    %86 = arith.mulf %81, %85 : vector<2x32xf32>
    %87 = tpu.concatenate %77, %86 in 1 : vector<2x32xf32>, vector<2x32xf32> -> vector<2x64xf32>
    %88 = arith.truncf %87 : vector<2x64xf32> to vector<2x64xbf16>
    %cst_15 = arith.constant dense<0.000000e+00> : vector<2x256xf32>
    %89 = tpu.matmul %88, %11, %cst_15 {dimension_numbers = #tpu.dot_dimension_numbers<[1], [0], [0], [1], [0, 0, 1, 1], [], []>} : vector<2x64xbf16>, vector<64x256xbf16>, vector<2x256xf32> -> vector<2x256xf32>
    %90 = vector.extract_strided_slice %10 {offsets = [6, 0], sizes = [2, 256], strides = [1, 1]} : vector<16x256xf32> to vector<2x256xf32>
    %91 = arith.addf %89, %90 : vector<2x256xf32>
    %92 = arith.negf %91 : vector<2x256xf32>
    %93 = math.exp %92 : vector<2x256xf32>
    %cst_16 = arith.constant 1.000000e+00 : f32
    %94 = vector.broadcast %cst_16 : f32 to vector<2x256xf32>
    %95 = arith.addf %94, %93 : vector<2x256xf32>
    %96 = arith.divf %94, %95 : vector<2x256xf32>
    %97 = math.tanh %91 : vector<2x256xf32>
    %98 = vector.extract_strided_slice %96 {offsets = [0, 0], sizes = [2, 32], strides = [1, 1]} : vector<2x256xf32> to vector<2x32xf32>
    %99 = vector.extract_strided_slice %96 {offsets = [0, 32], sizes = [2, 32], strides = [1, 1]} : vector<2x256xf32> to vector<2x32xf32>
    %100 = vector.extract_strided_slice %97 {offsets = [0, 64], sizes = [2, 32], strides = [1, 1]} : vector<2x256xf32> to vector<2x32xf32>
    %101 = vector.extract_strided_slice %96 {offsets = [0, 96], sizes = [2, 32], strides = [1, 1]} : vector<2x256xf32> to vector<2x32xf32>
    %102 = arith.mulf %99, %75 : vector<2x32xf32>
    %103 = arith.mulf %98, %100 : vector<2x32xf32>
    %104 = arith.addf %102, %103 : vector<2x32xf32>
    %105 = math.tanh %104 : vector<2x32xf32>
    %106 = arith.mulf %101, %105 : vector<2x32xf32>
    %107 = vector.extract_strided_slice %96 {offsets = [0, 128], sizes = [2, 32], strides = [1, 1]} : vector<2x256xf32> to vector<2x32xf32>
    %108 = vector.extract_strided_slice %96 {offsets = [0, 160], sizes = [2, 32], strides = [1, 1]} : vector<2x256xf32> to vector<2x32xf32>
    %109 = vector.extract_strided_slice %97 {offsets = [0, 192], sizes = [2, 32], strides = [1, 1]} : vector<2x256xf32> to vector<2x32xf32>
    %110 = vector.extract_strided_slice %96 {offsets = [0, 224], sizes = [2, 32], strides = [1, 1]} : vector<2x256xf32> to vector<2x32xf32>
    %111 = arith.mulf %108, %84 : vector<2x32xf32>
    %112 = arith.mulf %107, %109 : vector<2x32xf32>
    %113 = arith.addf %111, %112 : vector<2x32xf32>
    %114 = math.tanh %113 : vector<2x32xf32>
    %115 = arith.mulf %110, %114 : vector<2x32xf32>
    %116 = tpu.concatenate %106, %115 in 1 : vector<2x32xf32>, vector<2x32xf32> -> vector<2x64xf32>
    %117 = arith.truncf %116 : vector<2x64xf32> to vector<2x64xbf16>
    %cst_17 = arith.constant dense<0.000000e+00> : vector<2x256xf32>
    %118 = tpu.matmul %117, %11, %cst_17 {dimension_numbers = #tpu.dot_dimension_numbers<[1], [0], [0], [1], [0, 0, 1, 1], [], []>} : vector<2x64xbf16>, vector<64x256xbf16>, vector<2x256xf32> -> vector<2x256xf32>
    %119 = vector.extract_strided_slice %10 {offsets = [8, 0], sizes = [2, 256], strides = [1, 1]} : vector<16x256xf32> to vector<2x256xf32>
    %120 = arith.addf %118, %119 : vector<2x256xf32>
    %121 = arith.negf %120 : vector<2x256xf32>
    %122 = math.exp %121 : vector<2x256xf32>
    %cst_18 = arith.constant 1.000000e+00 : f32
    %123 = vector.broadcast %cst_18 : f32 to vector<2x256xf32>
    %124 = arith.addf %123, %122 : vector<2x256xf32>
    %125 = arith.divf %123, %124 : vector<2x256xf32>
    %126 = math.tanh %120 : vector<2x256xf32>
    %127 = vector.extract_strided_slice %125 {offsets = [0, 0], sizes = [2, 32], strides = [1, 1]} : vector<2x256xf32> to vector<2x32xf32>
    %128 = vector.extract_strided_slice %125 {offsets = [0, 32], sizes = [2, 32], strides = [1, 1]} : vector<2x256xf32> to vector<2x32xf32>
    %129 = vector.extract_strided_slice %126 {offsets = [0, 64], sizes = [2, 32], strides = [1, 1]} : vector<2x256xf32> to vector<2x32xf32>
    %130 = vector.extract_strided_slice %125 {offsets = [0, 96], sizes = [2, 32], strides = [1, 1]} : vector<2x256xf32> to vector<2x32xf32>
    %131 = arith.mulf %128, %104 : vector<2x32xf32>
    %132 = arith.mulf %127, %129 : vector<2x32xf32>
    %133 = arith.addf %131, %132 : vector<2x32xf32>
    %134 = math.tanh %133 : vector<2x32xf32>
    %135 = arith.mulf %130, %134 : vector<2x32xf32>
    %136 = vector.extract_strided_slice %125 {offsets = [0, 128], sizes = [2, 32], strides = [1, 1]} : vector<2x256xf32> to vector<2x32xf32>
    %137 = vector.extract_strided_slice %125 {offsets = [0, 160], sizes = [2, 32], strides = [1, 1]} : vector<2x256xf32> to vector<2x32xf32>
    %138 = vector.extract_strided_slice %126 {offsets = [0, 192], sizes = [2, 32], strides = [1, 1]} : vector<2x256xf32> to vector<2x32xf32>
    %139 = vector.extract_strided_slice %125 {offsets = [0, 224], sizes = [2, 32], strides = [1, 1]} : vector<2x256xf32> to vector<2x32xf32>
    %140 = arith.mulf %137, %113 : vector<2x32xf32>
    %141 = arith.mulf %136, %138 : vector<2x32xf32>
    %142 = arith.addf %140, %141 : vector<2x32xf32>
    %143 = math.tanh %142 : vector<2x32xf32>
    %144 = arith.mulf %139, %143 : vector<2x32xf32>
    %145 = tpu.concatenate %135, %144 in 1 : vector<2x32xf32>, vector<2x32xf32> -> vector<2x64xf32>
    %146 = arith.truncf %145 : vector<2x64xf32> to vector<2x64xbf16>
    %cst_19 = arith.constant dense<0.000000e+00> : vector<2x256xf32>
    %147 = tpu.matmul %146, %11, %cst_19 {dimension_numbers = #tpu.dot_dimension_numbers<[1], [0], [0], [1], [0, 0, 1, 1], [], []>} : vector<2x64xbf16>, vector<64x256xbf16>, vector<2x256xf32> -> vector<2x256xf32>
    %148 = vector.extract_strided_slice %10 {offsets = [10, 0], sizes = [2, 256], strides = [1, 1]} : vector<16x256xf32> to vector<2x256xf32>
    %149 = arith.addf %147, %148 : vector<2x256xf32>
    %150 = arith.negf %149 : vector<2x256xf32>
    %151 = math.exp %150 : vector<2x256xf32>
    %cst_20 = arith.constant 1.000000e+00 : f32
    %152 = vector.broadcast %cst_20 : f32 to vector<2x256xf32>
    %153 = arith.addf %152, %151 : vector<2x256xf32>
    %154 = arith.divf %152, %153 : vector<2x256xf32>
    %155 = math.tanh %149 : vector<2x256xf32>
    %156 = vector.extract_strided_slice %154 {offsets = [0, 0], sizes = [2, 32], strides = [1, 1]} : vector<2x256xf32> to vector<2x32xf32>
    %157 = vector.extract_strided_slice %154 {offsets = [0, 32], sizes = [2, 32], strides = [1, 1]} : vector<2x256xf32> to vector<2x32xf32>
    %158 = vector.extract_strided_slice %155 {offsets = [0, 64], sizes = [2, 32], strides = [1, 1]} : vector<2x256xf32> to vector<2x32xf32>
    %159 = vector.extract_strided_slice %154 {offsets = [0, 96], sizes = [2, 32], strides = [1, 1]} : vector<2x256xf32> to vector<2x32xf32>
    %160 = arith.mulf %157, %133 : vector<2x32xf32>
    %161 = arith.mulf %156, %158 : vector<2x32xf32>
    %162 = arith.addf %160, %161 : vector<2x32xf32>
    %163 = math.tanh %162 : vector<2x32xf32>
    %164 = arith.mulf %159, %163 : vector<2x32xf32>
    %165 = vector.extract_strided_slice %154 {offsets = [0, 128], sizes = [2, 32], strides = [1, 1]} : vector<2x256xf32> to vector<2x32xf32>
    %166 = vector.extract_strided_slice %154 {offsets = [0, 160], sizes = [2, 32], strides = [1, 1]} : vector<2x256xf32> to vector<2x32xf32>
    %167 = vector.extract_strided_slice %155 {offsets = [0, 192], sizes = [2, 32], strides = [1, 1]} : vector<2x256xf32> to vector<2x32xf32>
    %168 = vector.extract_strided_slice %154 {offsets = [0, 224], sizes = [2, 32], strides = [1, 1]} : vector<2x256xf32> to vector<2x32xf32>
    %169 = arith.mulf %166, %142 : vector<2x32xf32>
    %170 = arith.mulf %165, %167 : vector<2x32xf32>
    %171 = arith.addf %169, %170 : vector<2x32xf32>
    %172 = math.tanh %171 : vector<2x32xf32>
    %173 = arith.mulf %168, %172 : vector<2x32xf32>
    %174 = tpu.concatenate %164, %173 in 1 : vector<2x32xf32>, vector<2x32xf32> -> vector<2x64xf32>
    %175 = arith.truncf %174 : vector<2x64xf32> to vector<2x64xbf16>
    %cst_21 = arith.constant dense<0.000000e+00> : vector<2x256xf32>
    %176 = tpu.matmul %175, %11, %cst_21 {dimension_numbers = #tpu.dot_dimension_numbers<[1], [0], [0], [1], [0, 0, 1, 1], [], []>} : vector<2x64xbf16>, vector<64x256xbf16>, vector<2x256xf32> -> vector<2x256xf32>
    %177 = vector.extract_strided_slice %10 {offsets = [12, 0], sizes = [2, 256], strides = [1, 1]} : vector<16x256xf32> to vector<2x256xf32>
    %178 = arith.addf %176, %177 : vector<2x256xf32>
    %179 = arith.negf %178 : vector<2x256xf32>
    %180 = math.exp %179 : vector<2x256xf32>
    %cst_22 = arith.constant 1.000000e+00 : f32
    %181 = vector.broadcast %cst_22 : f32 to vector<2x256xf32>
    %182 = arith.addf %181, %180 : vector<2x256xf32>
    %183 = arith.divf %181, %182 : vector<2x256xf32>
    %184 = math.tanh %178 : vector<2x256xf32>
    %185 = vector.extract_strided_slice %183 {offsets = [0, 0], sizes = [2, 32], strides = [1, 1]} : vector<2x256xf32> to vector<2x32xf32>
    %186 = vector.extract_strided_slice %183 {offsets = [0, 32], sizes = [2, 32], strides = [1, 1]} : vector<2x256xf32> to vector<2x32xf32>
    %187 = vector.extract_strided_slice %184 {offsets = [0, 64], sizes = [2, 32], strides = [1, 1]} : vector<2x256xf32> to vector<2x32xf32>
    %188 = vector.extract_strided_slice %183 {offsets = [0, 96], sizes = [2, 32], strides = [1, 1]} : vector<2x256xf32> to vector<2x32xf32>
    %189 = arith.mulf %186, %162 : vector<2x32xf32>
    %190 = arith.mulf %185, %187 : vector<2x32xf32>
    %191 = arith.addf %189, %190 : vector<2x32xf32>
    %192 = math.tanh %191 : vector<2x32xf32>
    %193 = arith.mulf %188, %192 : vector<2x32xf32>
    %194 = vector.extract_strided_slice %183 {offsets = [0, 128], sizes = [2, 32], strides = [1, 1]} : vector<2x256xf32> to vector<2x32xf32>
    %195 = vector.extract_strided_slice %183 {offsets = [0, 160], sizes = [2, 32], strides = [1, 1]} : vector<2x256xf32> to vector<2x32xf32>
    %196 = vector.extract_strided_slice %184 {offsets = [0, 192], sizes = [2, 32], strides = [1, 1]} : vector<2x256xf32> to vector<2x32xf32>
    %197 = vector.extract_strided_slice %183 {offsets = [0, 224], sizes = [2, 32], strides = [1, 1]} : vector<2x256xf32> to vector<2x32xf32>
    %198 = arith.mulf %195, %171 : vector<2x32xf32>
    %199 = arith.mulf %194, %196 : vector<2x32xf32>
    %200 = arith.addf %198, %199 : vector<2x32xf32>
    %201 = math.tanh %200 : vector<2x32xf32>
    %202 = arith.mulf %197, %201 : vector<2x32xf32>
    %203 = tpu.concatenate %193, %202 in 1 : vector<2x32xf32>, vector<2x32xf32> -> vector<2x64xf32>
    %204 = arith.truncf %203 : vector<2x64xf32> to vector<2x64xbf16>
    %cst_23 = arith.constant dense<0.000000e+00> : vector<2x256xf32>
    %205 = tpu.matmul %204, %11, %cst_23 {dimension_numbers = #tpu.dot_dimension_numbers<[1], [0], [0], [1], [0, 0, 1, 1], [], []>} : vector<2x64xbf16>, vector<64x256xbf16>, vector<2x256xf32> -> vector<2x256xf32>
    %206 = vector.extract_strided_slice %10 {offsets = [14, 0], sizes = [2, 256], strides = [1, 1]} : vector<16x256xf32> to vector<2x256xf32>
    %207 = arith.addf %205, %206 : vector<2x256xf32>
    %208 = arith.negf %207 : vector<2x256xf32>
    %209 = math.exp %208 : vector<2x256xf32>
    %cst_24 = arith.constant 1.000000e+00 : f32
    %210 = vector.broadcast %cst_24 : f32 to vector<2x256xf32>
    %211 = arith.addf %210, %209 : vector<2x256xf32>
    %212 = arith.divf %210, %211 : vector<2x256xf32>
    %213 = math.tanh %207 : vector<2x256xf32>
    %214 = vector.extract_strided_slice %212 {offsets = [0, 0], sizes = [2, 32], strides = [1, 1]} : vector<2x256xf32> to vector<2x32xf32>
    %215 = vector.extract_strided_slice %212 {offsets = [0, 32], sizes = [2, 32], strides = [1, 1]} : vector<2x256xf32> to vector<2x32xf32>
    %216 = vector.extract_strided_slice %213 {offsets = [0, 64], sizes = [2, 32], strides = [1, 1]} : vector<2x256xf32> to vector<2x32xf32>
    %217 = vector.extract_strided_slice %212 {offsets = [0, 96], sizes = [2, 32], strides = [1, 1]} : vector<2x256xf32> to vector<2x32xf32>
    %218 = arith.mulf %215, %191 : vector<2x32xf32>
    %219 = arith.mulf %214, %216 : vector<2x32xf32>
    %220 = arith.addf %218, %219 : vector<2x32xf32>
    %221 = math.tanh %220 : vector<2x32xf32>
    %222 = arith.mulf %217, %221 : vector<2x32xf32>
    %223 = vector.extract_strided_slice %212 {offsets = [0, 128], sizes = [2, 32], strides = [1, 1]} : vector<2x256xf32> to vector<2x32xf32>
    %224 = vector.extract_strided_slice %212 {offsets = [0, 160], sizes = [2, 32], strides = [1, 1]} : vector<2x256xf32> to vector<2x32xf32>
    %225 = vector.extract_strided_slice %213 {offsets = [0, 192], sizes = [2, 32], strides = [1, 1]} : vector<2x256xf32> to vector<2x32xf32>
    %226 = vector.extract_strided_slice %212 {offsets = [0, 224], sizes = [2, 32], strides = [1, 1]} : vector<2x256xf32> to vector<2x32xf32>
    %227 = arith.mulf %224, %200 : vector<2x32xf32>
    %228 = arith.mulf %223, %225 : vector<2x32xf32>
    %229 = arith.addf %227, %228 : vector<2x32xf32>
    %230 = math.tanh %229 : vector<2x32xf32>
    %231 = arith.mulf %226, %230 : vector<2x32xf32>
    %232 = tpu.concatenate %222, %231 in 1 : vector<2x32xf32>, vector<2x32xf32> -> vector<2x64xf32>
    %233 = arith.truncf %232 : vector<2x64xf32> to vector<2x64xbf16>
    %cst_25 = arith.constant dense<0.000000e+00> : vector<2x256xf32>
    %234 = tpu.matmul %233, %11, %cst_25 {dimension_numbers = #tpu.dot_dimension_numbers<[1], [0], [0], [1], [0, 0, 1, 1], [], []>} : vector<2x64xbf16>, vector<64x256xbf16>, vector<2x256xf32> -> vector<2x256xf32>
    %235 = vector.extract_strided_slice %234 {offsets = [0, 128], sizes = [2, 128], strides = [1, 1]} : vector<2x256xf32> to vector<2x128xf32>
    %236 = vector.extract_strided_slice %10 {offsets = [0, 128], sizes = [2, 128], strides = [1, 1]} : vector<16x256xf32> to vector<2x128xf32>
    %237 = arith.addf %235, %236 : vector<2x128xf32>
    %238 = arith.negf %237 : vector<2x128xf32>
    %239 = math.exp %238 : vector<2x128xf32>
    %cst_26 = arith.constant 1.000000e+00 : f32
    %240 = vector.broadcast %cst_26 : f32 to vector<2x128xf32>
    %241 = arith.addf %240, %239 : vector<2x128xf32>
    %242 = arith.divf %240, %241 : vector<2x128xf32>
    %243 = math.tanh %237 : vector<2x128xf32>
    %244 = vector.extract_strided_slice %242 {offsets = [0, 0], sizes = [2, 32], strides = [1, 1]} : vector<2x128xf32> to vector<2x32xf32>
    %245 = vector.extract_strided_slice %242 {offsets = [0, 32], sizes = [2, 32], strides = [1, 1]} : vector<2x128xf32> to vector<2x32xf32>
    %246 = vector.extract_strided_slice %243 {offsets = [0, 64], sizes = [2, 32], strides = [1, 1]} : vector<2x128xf32> to vector<2x32xf32>
    %247 = vector.extract_strided_slice %242 {offsets = [0, 96], sizes = [2, 32], strides = [1, 1]} : vector<2x128xf32> to vector<2x32xf32>
    %248 = arith.mulf %245, %229 : vector<2x32xf32>
    %249 = arith.mulf %244, %246 : vector<2x32xf32>
    %250 = arith.addf %248, %249 : vector<2x32xf32>
    %251 = math.tanh %250 : vector<2x32xf32>
    %252 = arith.mulf %247, %251 : vector<2x32xf32>
    %c0_27 = arith.constant 0 : index
    %c0_28 = arith.constant 0 : index
    %253 = vector.load %arg5[%c0_27, %c0_28] : memref<2x32xf32, #tpu.memory_space<vmem>>, vector<2x32xf32>
    tpu.vector_store %arg5[%c0_27, %c0_28], %252 {strides = array<i32>} : memref<2x32xf32, #tpu.memory_space<vmem>>, vector<2x32xf32>,
    return
  }
}

</mosaic_0001>

<llo_original>
// kernel: rnn_forward.1
$region0: #{rnn_forward.1}
  #allocation0 [shape = 'u32[]', space=smem, size = 0x4, offset = 0x4, fixed_abs, tag = 'smem constant byte address 0x4 - core index']
  #allocation1 [shape = 'u32[144,128]{1,0:T(1,128)}', space=vmem, size = 0x12000, scoped, tag = 'internal scratch']
  %s0 = inlined_call_operand.vmem [shape: f32[16,32], index: 0, kind: input, shape index: {}]
  %s1 = inlined_call_operand.vmem [shape: bf16[32,128], index: 1, kind: input, shape index: {}]
  %s2 = inlined_call_operand.vmem [shape: f32[1,128], index: 2, kind: input, shape index: {}]
  %s3 = inlined_call_operand.hbm [shape: bf16[64,256], index: 3, kind: input, shape index: {}]
  %s4 = inlined_call_operand.vmem [shape: f32[1,128], index: 4, kind: input, shape index: {}]
  %s5 = inlined_call_operand.hbm [shape: f32[2,32], index: 5, kind: output, shape index: {}]
  %s6 = sld [smem:[#allocation0]]
  $region34: #{rnn_forward.1} parent=0
    _
  %s8 = ssub.s32 1, %s6
  %s9 = scalar_select 0, %s8, %s6
  $region1: #{rnn_forward.1} parent=0
    #allocation2 [shape = 'u8[32768]{0}', space=vmem, size = 0x8000, scoped, tag = 'input window, operand 3, single buffered']
    #allocation3 [shape = 's32[1]{0}', space=sflag, size = 0x4, scoped, tag = 'scoped memory for rnn_forward.1']
    #allocation4 [shape = 's32[1]{0}', space=sflag, size = 0x4, scoped, tag = 'scoped memory for rnn_forward.1']
    #allocation5 [shape = 'u8[1024]{0}', space=vmem, size = 0x400, scoped, tag = 'output window, operand 0, single buffered']
    %10 = vsyncpa [#allocation3], 0
    %11 = vsyncpa [#allocation4], 0
    // Predicated region
    $region2: #{rnn_forward.1} parent=1 // pred_check
      _
    $region3: #{rnn_forward.1} parent=1 // pred_check_branch
      %13 = sbr.rel (0) target = $region5
    $region4: #{rnn_forward.1} parent=1 // pred_region
      _
    $region5: #{rnn_forward.1} parent=1 // pred_fallthru
      _
    // Predicated region
    $region6: #{rnn_forward.1} parent=1 // pred_check
      _
    $region7: #{rnn_forward.1} parent=1 // pred_check_branch
      %15 = sbr.rel (0) target = $region9
    $region8: #{rnn_forward.1} parent=1 // pred_region
      _
    $region9: #{rnn_forward.1} parent=1 // pred_fallthru
      _
    // Predicated region
    $region10: #{rnn_forward.1} parent=1 // pred_check
      _
    $region11: #{rnn_forward.1} parent=1 // pred_check_branch
      %17 = sbr.rel (0) target = $region13
    $region12: #{rnn_forward.1} parent=1 // pred_region
      _
    $region13: #{rnn_forward.1} parent=1 // pred_fallthru
      _
    // Predicated region
    $region14: #{rnn_forward.1} parent=1 // pred_check
      _
    $region15: #{rnn_forward.1} parent=1 // pred_check_branch
      %19 = sbr.rel (0) target = $region17
    $region16: #{rnn_forward.1} parent=1 // pred_region
      %s21 = ssub.s32 1024, 1024
      %22 = vsyncadd [#allocation3], %s21
      %s23 = sshll.u32 [#allocation2], 4
      %s24 = int_to_ptr.vmem [resolvable:$true] %s23
      %29 = dma.hbm_to_vmem [thread:$0]  %s3, 1024, %s24, [#allocation3], 128, 128, 8
    $region17: #{rnn_forward.1} parent=1 // pred_fallthru
      _
    // Predicated region
    $region18: #{rnn_forward.1} parent=1 // pred_check
      _
    $region19: #{rnn_forward.1} parent=1 // pred_check_branch
      %31 = sbr.rel (0) target = $region21
    $region20: #{rnn_forward.1} parent=1 // pred_region
      _
    $region21: #{rnn_forward.1} parent=1 // pred_fallthru
      _
    // Predicated region
    $region22: #{rnn_forward.1} parent=1 // pred_check
      _
    $region23: #{rnn_forward.1} parent=1 // pred_check_branch
      %33 = sbr.rel (0) target = $region25
    $region24: #{rnn_forward.1} parent=1 // pred_region
      %34 = dma.done [#allocation3], 1024
    $region25: #{rnn_forward.1} parent=1 // pred_fallthru
      _
    %v36 = vld [vmem:[%s0] sm:$0xff]
    %v37 = vld [vmem:[%s0 + $0x8] sm:$0xff]
    %v38 = vpack.c.bf16 %v37, %v36
    %v39 = vld [vmem:[%s1] sm:$0xf]
    %v40 = vld [vmem:[%s1 + $0x4] sm:$0xf]
    %v41 = vld [vmem:[%s1 + $0x8] sm:$0xf]
    %v42 = vld [vmem:[%s1 + $0xc] sm:$0xf]
    %v43 = vld [vmem:[%s2] sm:$0x1]
    %v45 = vlaneseq
    %v46 = vshrl.u32 %v45, 7
    %v47 = vsub.s32 0, %v46
    %v48 = vrot.slane %v43, %v47
    %v54 = vunpack.c.l.b16 %v39
    %v55 = vunpack.c.l.b16 %v40
    %v56 = vunpack.c.l.b16 %v41
    %v57 = vunpack.c.l.b16 %v42
    %v58 = vpack.c.b16 %v55, %v54
    %v59 = vpack.c.b16 %v57, %v56
    %vm62 = vcmask 261120
    %v64 = vsel %vm62, %v38, 0
    %66 = vmatprep.subr.bf16.mxu0 0
    %67 = vmatpush1.bf16.msra.mxu0 %v58
    %68 = vmatprep.subr.bf16.mxu0 0
    %69 = vmatpush1.bf16.msra.mxu0 %v59
    %70 = vmatprep.subr.bf16.mxu0 0
    %71 = vmatpush1.bf16.msra.mxu0 0
    %72 = vmatprep.subr.bf16.mxu0 0
    %73 = vmatpush1.bf16.msra.mxu0 0
    %74 = vmatprep.subr.bf16.mxu0 0
    %75 = vmatpush1.bf16.msra.mxu0 0
    %76 = vmatprep.subr.bf16.mxu0 0
    %77 = vmatpush1.bf16.msra.mxu0 0
    %78 = vmatprep.subr.bf16.mxu0 0
    %79 = vmatpush1.bf16.msra.mxu0 0
    %80 = vmatprep.subr.bf16.mxu0 0
    %81 = vmatpush1.bf16.msra.mxu0 0
    %82 = vmatprep.subr.bf16.mxu0 0
    %83 = vmatpush1.bf16.msra.mxu0 0
    %84 = vmatprep.subr.bf16.mxu0 0
    %85 = vmatpush1.bf16.msra.mxu0 0
    %86 = vmatprep.subr.bf16.mxu0 0
    %87 = vmatpush1.bf16.msra.mxu0 0
    %88 = vmatprep.subr.bf16.mxu0 0
    %89 = vmatpush1.bf16.msra.mxu0 0
    %90 = vmatprep.subr.bf16.mxu0 0
    %91 = vmatpush1.bf16.msra.mxu0 0
    %92 = vmatprep.subr.bf16.mxu0 0
    %93 = vmatpush1.bf16.msra.mxu0 0
    %94 = vmatprep.subr.bf16.mxu0 0
    %95 = vmatpush1.bf16.msra.mxu0 0
    %96 = vmatprep.subr.bf16.mxu0 0
    %97 = vmatpush1.bf16.msra.mxu0 0
    %98 = vmatprep.mubr.bf16.mxu0 0
    %99 = vmatmul.mubr.bf16.gmra.mrb[0].mxu0 %v64
    %v100 = vpop.f32.mrb[0].mxu0
    %v101 = vadd.f32 %v48, %v100
    %v102 = vpop.f32.mrb[0].mxu0
    %v103 = vpop.f32.mrb[0].mxu0
    %v104 = vadd.f32 %v48, %v103
    %v105 = vpop.f32.mrb[0].mxu0
    %106 = vdwg.mxu0
    %v107 = vld [vmem:[%s4] sm:$0x1]
    %v109 = vlaneseq
    %v110 = vshrl.u32 %v109, 7
    %v111 = vsub.s32 0, %v110
    %v112 = vrot.slane %v107, %v111
    %v114 = vld [vmem:[#allocation2] sm:$0xff]
    %v115 = vld [vmem:[#allocation2 + $0x8] sm:$0xff]
    %v116 = vld [vmem:[#allocation2 + $0x10] sm:$0xff]
    %v117 = vld [vmem:[#allocation2 + $0x18] sm:$0xff]
    %v118 = vld [vmem:[#allocation2 + $0x20] sm:$0xff]
    %v119 = vld [vmem:[#allocation2 + $0x28] sm:$0xff]
    %v120 = vld [vmem:[#allocation2 + $0x30] sm:$0xff]
    %v121 = vld [vmem:[#allocation2 + $0x38] sm:$0xff]
    %v122 = vxor.u32 %v101, 2147483648
    %v123 = vmul.f32 %v122, 1.442695
    %v124 = vpow.pop %v123
    %v125 = vadd.f32 %v124, 1.0
    %v126 = vrcp.pop %v125
    %v127 = vmul.f32 1.0, %v126
    %v128 = vtanh.pop %v101
    %v129 = vmul.f32 %v127, 0.0
    %131 = vrot.lane.b32.xlu0 %v128, 64
    %v132 = vpop.permute.xlu0 %131
    %v134 = vmul.f32 %v127, %v132
    %136 = vrot.lane.b32.xlu0 %v134, 32
    %v137 = vpop.permute.xlu0 %136
    %v139 = vadd.f32 %v129, %v137
    %v140 = vtanh.pop %v139
    %142 = vrot.lane.b32.xlu0 %v140, 64
    %v143 = vpop.permute.xlu0 %142
    %v145 = vmul.f32 %v127, %v143
    %147 = vrot.lane.b32.xlu0 %v145, 32
    %v148 = vpop.permute.xlu0 %147
    %v150 = vsel %vm62, %v148, 0.0
    %v151 = vpack.c.bf16 %v150, %v150
    %v160 = vunpack.c.l.b16 %v114
    %v161 = vunpack.c.h.b16 %v114
    %v162 = vunpack.c.l.b16 %v115
    %v163 = vunpack.c.h.b16 %v115
    %v164 = vunpack.c.l.b16 %v116
    %v165 = vunpack.c.h.b16 %v116
    %v166 = vunpack.c.l.b16 %v117
    %v167 = vunpack.c.h.b16 %v117
    %v168 = vunpack.c.l.b16 %v118
    %v169 = vunpack.c.h.b16 %v118
    %v170 = vunpack.c.l.b16 %v119
    %v171 = vunpack.c.h.b16 %v119
    %v172 = vunpack.c.l.b16 %v120
    %v173 = vunpack.c.h.b16 %v120
    %v174 = vunpack.c.l.b16 %v121
    %v175 = vunpack.c.h.b16 %v121
    %v176 = vpack.c.b16 %v162, %v160
    %v177 = vpack.c.b16 %v163, %v161
    %v178 = vpack.c.b16 %v166, %v164
    %v179 = vpack.c.b16 %v167, %v165
    %v180 = vpack.c.b16 %v170, %v168
    %v181 = vpack.c.b16 %v171, %v169
    %v182 = vpack.c.b16 %v174, %v172
    %v183 = vpack.c.b16 %v175, %v173
    %v193 = vrot.slane %v101, 2
    %v194 = vrot.slane %v112, 2
    %vm197 = vcmask 523264
    %v199 = vsel %vm197, %v151, 0
    %201 = vmatprep.subr.bf16.mxu0 %v177
    %202 = vmatpush1.bf16.msra.mxu0 %v176
    %203 = vmatprep.subr.bf16.mxu0 %v179
    %204 = vmatpush1.bf16.msra.mxu0 %v178
    %205 = vmatprep.subr.bf16.mxu0 %v181
    %206 = vmatpush1.bf16.msra.mxu0 %v180
    %207 = vmatprep.subr.bf16.mxu0 %v183
    %208 = vmatpush1.bf16.msra.mxu0 %v182
    %209 = vmatprep.subr.bf16.mxu0 0
    %210 = vmatpush1.bf16.msra.mxu0 0
    %211 = vmatprep.subr.bf16.mxu0 0
    %212 = vmatpush1.bf16.msra.mxu0 0
    %213 = vmatprep.subr.bf16.mxu0 0
    %214 = vmatpush1.bf16.msra.mxu0 0
    %215 = vmatprep.subr.bf16.mxu0 0
    %216 = vmatpush1.bf16.msra.mxu0 0
    %217 = vmatprep.subr.bf16.mxu0 0
    %218 = vmatpush1.bf16.msra.mxu0 0
    %219 = vmatprep.subr.bf16.mxu0 0
    %220 = vmatpush1.bf16.msra.mxu0 0
    %221 = vmatprep.subr.bf16.mxu0 0
    %222 = vmatpush1.bf16.msra.mxu0 0
    %223 = vmatprep.subr.bf16.mxu0 0
    %224 = vmatpush1.bf16.msra.mxu0 0
    %225 = vmatprep.subr.bf16.mxu0 0
    %226 = vmatpush1.bf16.msra.mxu0 0
    %227 = vmatprep.subr.bf16.mxu0 0
    %228 = vmatpush1.bf16.msra.mxu0 0
    %229 = vmatprep.subr.bf16.mxu0 0
    %230 = vmatpush1.bf16.msra.mxu0 0
    %231 = vmatprep.subr.bf16.mxu0 0
    %232 = vmatpush1.bf16.msra.mxu0 0
    %233 = vmatprep.mubr.bf16.mxu0 0
    %234 = vmatmul.mubr.bf16.gmra.mrb[0].mxu0 %v199
    %v235 = vpop.f32.mrb[0].mxu0
    %v236 = vadd.f32 %v193, %v235
    %v237 = vpop.f32.mrb[0].mxu0
    %v238 = vadd.f32 %v194, %v237
    %v239 = vpop.f32.mrb[0].mxu0
    %v240 = vpop.f32.mrb[0].mxu0
    %241 = vdwg.mxu0
    %v242 = vxor.u32 %v236, 2147483648
    %v243 = vxor.u32 %v238, 2147483648
    %v244 = vmul.f32 %v242, 1.442695
    %v245 = vpow.pop %v244
    %v246 = vmul.f32 %v243, 1.442695
    %v247 = vpow.pop %v246
    %v248 = vadd.f32 %v245, 1.0
    %v249 = vadd.f32 %v247, 1.0
    %v250 = vrcp.pop %v248
    %v251 = vmul.f32 1.0, %v250
    %v252 = vrcp.pop %v249
    %v253 = vmul.f32 1.0, %v252
    %v254 = vtanh.pop %v236
    %v255 = vtanh.pop %v238
    %v256 = vmul.f32 %v251, %v139
    %258 = vrot.lane.b32.xlu0 %v254, 64
    %v259 = vpop.permute.xlu0 %258
    %v261 = vmul.f32 %v251, %v259
    %263 = vrot.lane.b32.xlu0 %v261, 32
    %v264 = vpop.permute.xlu0 %263
    %v266 = vadd.f32 %v256, %v264
    %v267 = vtanh.pop %v266
    %269 = vrot.lane.b32.xlu0 %v267, 64
    %v270 = vpop.permute.xlu0 %269
    %v272 = vmul.f32 %v251, %v270
    %v273 = vmul.f32 %v253, 0.0
    %275 = vrot.lane.b32.xlu0 %v255, 64
    %v276 = vpop.permute.xlu0 %275
    %v278 = vmul.f32 %v253, %v276
    %280 = vrot.lane.b32.xlu0 %v278, 32
    %v281 = vpop.permute.xlu0 %280
    %v283 = vadd.f32 %v273, %v281
    %v284 = vtanh.pop %v283
    %286 = vrot.lane.b32.xlu0 %v284, 64
    %v287 = vpop.permute.xlu0 %286
    %v289 = vmul.f32 %v253, %v287
    %291 = vrot.lane.b32.xlu0 %v272, 32
    %v292 = vpop.permute.xlu0 %291
    %295 = vrot.lane.b32.xlu0 %v289, 64
    %v296 = vpop.permute.xlu0 %295
    %v298 = vsel %vm62, %v292, %v296
    %v299 = vpack.c.bf16 %v298, %v298
    %v300 = vrot.slane %v101, 4
    %v301 = vrot.slane %v112, 4
    %v305 = vsel %vm197, %v299, 0
    %307 = vmatprep.subr.bf16.mxu0 %v177
    %308 = vmatpush1.bf16.msra.mxu0 %v176
    %309 = vmatprep.subr.bf16.mxu0 %v179
    %310 = vmatpush1.bf16.msra.mxu0 %v178
    %311 = vmatprep.subr.bf16.mxu0 %v181
    %312 = vmatpush1.bf16.msra.mxu0 %v180
    %313 = vmatprep.subr.bf16.mxu0 %v183
    %314 = vmatpush1.bf16.msra.mxu0 %v182
    %315 = vmatprep.subr.bf16.mxu0 0
    %316 = vmatpush1.bf16.msra.mxu0 0
    %317 = vmatprep.subr.bf16.mxu0 0
    %318 = vmatpush1.bf16.msra.mxu0 0
    %319 = vmatprep.subr.bf16.mxu0 0
    %320 = vmatpush1.bf16.msra.mxu0 0
    %321 = vmatprep.subr.bf16.mxu0 0
    %322 = vmatpush1.bf16.msra.mxu0 0
    %323 = vmatprep.subr.bf16.mxu0 0
    %324 = vmatpush1.bf16.msra.mxu0 0
    %325 = vmatprep.subr.bf16.mxu0 0
    %326 = vmatpush1.bf16.msra.mxu0 0
    %327 = vmatprep.subr.bf16.mxu0 0
    %328 = vmatpush1.bf16.msra.mxu0 0
    %329 = vmatprep.subr.bf16.mxu0 0
    %330 = vmatpush1.bf16.msra.mxu0 0
    %331 = vmatprep.subr.bf16.mxu0 0
    %332 = vmatpush1.bf16.msra.mxu0 0
    %333 = vmatprep.subr.bf16.mxu0 0
    %334 = vmatpush1.bf16.msra.mxu0 0
    %335 = vmatprep.subr.bf16.mxu0 0
    %336 = vmatpush1.bf16.msra.mxu0 0
    %337 = vmatprep.subr.bf16.mxu0 0
    %338 = vmatpush1.bf16.msra.mxu0 0
    %339 = vmatprep.mubr.bf16.mxu0 0
    %340 = vmatmul.mubr.bf16.gmra.mrb[0].mxu0 %v305
    %v341 = vpop.f32.mrb[0].mxu0
    %v342 = vadd.f32 %v300, %v341
    %v343 = vpop.f32.mrb[0].mxu0
    %v344 = vadd.f32 %v301, %v343
    %v345 = vpop.f32.mrb[0].mxu0
    %v346 = vpop.f32.mrb[0].mxu0
    %347 = vdwg.mxu0
    %v348 = vxor.u32 %v342, 2147483648
    %v349 = vxor.u32 %v344, 2147483648
    %v350 = vmul.f32 %v348, 1.442695
    %v351 = vpow.pop %v350
    %v352 = vmul.f32 %v349, 1.442695
    %v353 = vpow.pop %v352
    %v354 = vadd.f32 %v351, 1.0
    %v355 = vadd.f32 %v353, 1.0
    %v356 = vrcp.pop %v354
    %v357 = vmul.f32 1.0, %v356
    %v358 = vrcp.pop %v355
    %v359 = vmul.f32 1.0, %v358
    %v360 = vtanh.pop %v342
    %v361 = vtanh.pop %v344
    %v362 = vmul.f32 %v357, %v266
    %364 = vrot.lane.b32.xlu0 %v360, 64
    %v365 = vpop.permute.xlu0 %364
    %v367 = vmul.f32 %v357, %v365
    %369 = vrot.lane.b32.xlu0 %v367, 32
    %v370 = vpop.permute.xlu0 %369
    %v372 = vadd.f32 %v362, %v370
    %v373 = vtanh.pop %v372
    %375 = vrot.lane.b32.xlu0 %v373, 64
    %v376 = vpop.permute.xlu0 %375
    %v378 = vmul.f32 %v357, %v376
    %v379 = vmul.f32 %v359, %v283
    %381 = vrot.lane.b32.xlu0 %v361, 64
    %v382 = vpop.permute.xlu0 %381
    %v384 = vmul.f32 %v359, %v382
    %386 = vrot.lane.b32.xlu0 %v384, 32
    %v387 = vpop.permute.xlu0 %386
    %v389 = vadd.f32 %v379, %v387
    %v390 = vtanh.pop %v389
    %392 = vrot.lane.b32.xlu0 %v390, 64
    %v393 = vpop.permute.xlu0 %392
    %v395 = vmul.f32 %v359, %v393
    %397 = vrot.lane.b32.xlu0 %v378, 32
    %v398 = vpop.permute.xlu0 %397
    %401 = vrot.lane.b32.xlu0 %v395, 64
    %v402 = vpop.permute.xlu0 %401
    %v404 = vsel %vm62, %v398, %v402
    %v405 = vpack.c.bf16 %v404, %v404
    %v406 = vrot.slane %v101, 6
    %v407 = vrot.slane %v112, 6
    %v411 = vsel %vm197, %v405, 0
    %413 = vmatprep.subr.bf16.mxu0 %v177
    %414 = vmatpush1.bf16.msra.mxu0 %v176
    %415 = vmatprep.subr.bf16.mxu0 %v179
    %416 = vmatpush1.bf16.msra.mxu0 %v178
    %417 = vmatprep.subr.bf16.mxu0 %v181
    %418 = vmatpush1.bf16.msra.mxu0 %v180
    %419 = vmatprep.subr.bf16.mxu0 %v183
    %420 = vmatpush1.bf16.msra.mxu0 %v182
    %421 = vmatprep.subr.bf16.mxu0 0
    %422 = vmatpush1.bf16.msra.mxu0 0
    %423 = vmatprep.subr.bf16.mxu0 0
    %424 = vmatpush1.bf16.msra.mxu0 0
    %425 = vmatprep.subr.bf16.mxu0 0
    %426 = vmatpush1.bf16.msra.mxu0 0
    %427 = vmatprep.subr.bf16.mxu0 0
    %428 = vmatpush1.bf16.msra.mxu0 0
    %429 = vmatprep.subr.bf16.mxu0 0
    %430 = vmatpush1.bf16.msra.mxu0 0
    %431 = vmatprep.subr.bf16.mxu0 0
    %432 = vmatpush1.bf16.msra.mxu0 0
    %433 = vmatprep.subr.bf16.mxu0 0
    %434 = vmatpush1.bf16.msra.mxu0 0
    %435 = vmatprep.subr.bf16.mxu0 0
    %436 = vmatpush1.bf16.msra.mxu0 0
    %437 = vmatprep.subr.bf16.mxu0 0
    %438 = vmatpush1.bf16.msra.mxu0 0
    %439 = vmatprep.subr.bf16.mxu0 0
    %440 = vmatpush1.bf16.msra.mxu0 0
    %441 = vmatprep.subr.bf16.mxu0 0
    %442 = vmatpush1.bf16.msra.mxu0 0
    %443 = vmatprep.subr.bf16.mxu0 0
    %444 = vmatpush1.bf16.msra.mxu0 0
    %445 = vmatprep.mubr.bf16.mxu0 0
    %446 = vmatmul.mubr.bf16.gmra.mrb[0].mxu0 %v411
    %v447 = vpop.f32.mrb[0].mxu0
    %v448 = vadd.f32 %v406, %v447
    %v449 = vpop.f32.mrb[0].mxu0
    %v450 = vadd.f32 %v407, %v449
    %v451 = vpop.f32.mrb[0].mxu0
    %v452 = vpop.f32.mrb[0].mxu0
    %453 = vdwg.mxu0
    %v454 = vxor.u32 %v448, 2147483648
    %v455 = vxor.u32 %v450, 2147483648
    %v456 = vmul.f32 %v454, 1.442695
    %v457 = vpow.pop %v456
    %v458 = vmul.f32 %v455, 1.442695
    %v459 = vpow.pop %v458
    %v460 = vadd.f32 %v457, 1.0
    %v461 = vadd.f32 %v459, 1.0
    %v462 = vrcp.pop %v460
    %v463 = vmul.f32 1.0, %v462
    %v464 = vrcp.pop %v461
    %v465 = vmul.f32 1.0, %v464
    %v466 = vtanh.pop %v448
    %v467 = vtanh.pop %v450
    %v468 = vmul.f32 %v463, %v372
    %470 = vrot.lane.b32.xlu0 %v466, 64
    %v471 = vpop.permute.xlu0 %470
    %v473 = vmul.f32 %v463, %v471
    %475 = vrot.lane.b32.xlu0 %v473, 32
    %v476 = vpop.permute.xlu0 %475
    %v478 = vadd.f32 %v468, %v476
    %v479 = vtanh.pop %v478
    %481 = vrot.lane.b32.xlu0 %v479, 64
    %v482 = vpop.permute.xlu0 %481
    %v484 = vmul.f32 %v463, %v482
    %v485 = vmul.f32 %v465, %v389
    %487 = vrot.lane.b32.xlu0 %v467, 64
    %v488 = vpop.permute.xlu0 %487
    %v490 = vmul.f32 %v465, %v488
    %492 = vrot.lane.b32.xlu0 %v490, 32
    %v493 = vpop.permute.xlu0 %492
    %v495 = vadd.f32 %v485, %v493
    %v496 = vtanh.pop %v495
    %498 = vrot.lane.b32.xlu0 %v496, 64
    %v499 = vpop.permute.xlu0 %498
    %v501 = vmul.f32 %v465, %v499
    %503 = vrot.lane.b32.xlu0 %v484, 32
    %v504 = vpop.permute.xlu0 %503
    %507 = vrot.lane.b32.xlu0 %v501, 64
    %v508 = vpop.permute.xlu0 %507
    %v510 = vsel %vm62, %v504, %v508
    %v511 = vpack.c.bf16 %v510, %v510
    %v513 = vsel %vm197, %v511, 0
    %515 = vmatprep.subr.bf16.mxu0 %v177
    %516 = vmatpush1.bf16.msra.mxu0 %v176
    %517 = vmatprep.subr.bf16.mxu0 %v179
    %518 = vmatpush1.bf16.msra.mxu0 %v178
    %519 = vmatprep.subr.bf16.mxu0 %v181
    %520 = vmatpush1.bf16.msra.mxu0 %v180
    %521 = vmatprep.subr.bf16.mxu0 %v183
    %522 = vmatpush1.bf16.msra.mxu0 %v182
    %523 = vmatprep.subr.bf16.mxu0 0
    %524 = vmatpush1.bf16.msra.mxu0 0
    %525 = vmatprep.subr.bf16.mxu0 0
    %526 = vmatpush1.bf16.msra.mxu0 0
    %527 = vmatprep.subr.bf16.mxu0 0
    %528 = vmatpush1.bf16.msra.mxu0 0
    %529 = vmatprep.subr.bf16.mxu0 0
    %530 = vmatpush1.bf16.msra.mxu0 0
    %531 = vmatprep.subr.bf16.mxu0 0
    %532 = vmatpush1.bf16.msra.mxu0 0
    %533 = vmatprep.subr.bf16.mxu0 0
    %534 = vmatpush1.bf16.msra.mxu0 0
    %535 = vmatprep.subr.bf16.mxu0 0
    %536 = vmatpush1.bf16.msra.mxu0 0
    %537 = vmatprep.subr.bf16.mxu0 0
    %538 = vmatpush1.bf16.msra.mxu0 0
    %539 = vmatprep.subr.bf16.mxu0 0
    %540 = vmatpush1.bf16.msra.mxu0 0
    %541 = vmatprep.subr.bf16.mxu0 0
    %542 = vmatpush1.bf16.msra.mxu0 0
    %543 = vmatprep.subr.bf16.mxu0 0
    %544 = vmatpush1.bf16.msra.mxu0 0
    %545 = vmatprep.subr.bf16.mxu0 0
    %546 = vmatpush1.bf16.msra.mxu0 0
    %547 = vmatprep.mubr.bf16.mxu0 0
    %548 = vmatmul.mubr.bf16.gmra.mrb[0].mxu0 %v513
    %v549 = vpop.f32.mrb[0].mxu0
    %v550 = vadd.f32 %v104, %v549
    %v551 = vpop.f32.mrb[0].mxu0
    %v552 = vadd.f32 %v112, %v551
    %v553 = vpop.f32.mrb[0].mxu0
    %v554 = vpop.f32.mrb[0].mxu0
    %555 = vdwg.mxu0
    %v556 = vxor.u32 %v550, 2147483648
    %v557 = vxor.u32 %v552, 2147483648
    %v558 = vmul.f32 %v556, 1.442695
    %v559 = vpow.pop %v558
    %v560 = vmul.f32 %v557, 1.442695
    %v561 = vpow.pop %v560
    %v562 = vadd.f32 %v559, 1.0
    %v563 = vadd.f32 %v561, 1.0
    %v564 = vrcp.pop %v562
    %v565 = vmul.f32 1.0, %v564
    %v566 = vrcp.pop %v563
    %v567 = vmul.f32 1.0, %v566
    %v568 = vtanh.pop %v550
    %v569 = vtanh.pop %v552
    %v570 = vmul.f32 %v565, %v478
    %572 = vrot.lane.b32.xlu0 %v568, 64
    %v573 = vpop.permute.xlu0 %572
    %v575 = vmul.f32 %v565, %v573
    %577 = vrot.lane.b32.xlu0 %v575, 32
    %v578 = vpop.permute.xlu0 %577
    %v580 = vadd.f32 %v570, %v578
    %v581 = vtanh.pop %v580
    %583 = vrot.lane.b32.xlu0 %v581, 64
    %v584 = vpop.permute.xlu0 %583
    %v586 = vmul.f32 %v565, %v584
    %v587 = vmul.f32 %v567, %v495
    %589 = vrot.lane.b32.xlu0 %v569, 64
    %v590 = vpop.permute.xlu0 %589
    %v592 = vmul.f32 %v567, %v590
    %594 = vrot.lane.b32.xlu0 %v592, 32
    %v595 = vpop.permute.xlu0 %594
    %v597 = vadd.f32 %v587, %v595
    %v598 = vtanh.pop %v597
    %600 = vrot.lane.b32.xlu0 %v598, 64
    %v601 = vpop.permute.xlu0 %600
    %v603 = vmul.f32 %v567, %v601
    %605 = vrot.lane.b32.xlu0 %v586, 32
    %v606 = vpop.permute.xlu0 %605
    %609 = vrot.lane.b32.xlu0 %v603, 64
    %v610 = vpop.permute.xlu0 %609
    %v612 = vsel %vm62, %v606, %v610
    %v613 = vpack.c.bf16 %v612, %v612
    %v615 = vrot.slane %v104, 2
    %v618 = vsel %vm197, %v613, 0
    %620 = vmatprep.subr.bf16.mxu0 %v177
    %621 = vmatpush1.bf16.msra.mxu0 %v176
    %622 = vmatprep.subr.bf16.mxu0 %v179
    %623 = vmatpush1.bf16.msra.mxu0 %v178
    %624 = vmatprep.subr.bf16.mxu0 %v181
    %625 = vmatpush1.bf16.msra.mxu0 %v180
    %626 = vmatprep.subr.bf16.mxu0 %v183
    %627 = vmatpush1.bf16.msra.mxu0 %v182
    %628 = vmatprep.subr.bf16.mxu0 0
    %629 = vmatpush1.bf16.msra.mxu0 0
    %630 = vmatprep.subr.bf16.mxu0 0
    %631 = vmatpush1.bf16.msra.mxu0 0
    %632 = vmatprep.subr.bf16.mxu0 0
    %633 = vmatpush1.bf16.msra.mxu0 0
    %634 = vmatprep.subr.bf16.mxu0 0
    %635 = vmatpush1.bf16.msra.mxu0 0
    %636 = vmatprep.subr.bf16.mxu0 0
    %637 = vmatpush1.bf16.msra.mxu0 0
    %638 = vmatprep.subr.bf16.mxu0 0
    %639 = vmatpush1.bf16.msra.mxu0 0
    %640 = vmatprep.subr.bf16.mxu0 0
    %641 = vmatpush1.bf16.msra.mxu0 0
    %642 = vmatprep.subr.bf16.mxu0 0
    %643 = vmatpush1.bf16.msra.mxu0 0
    %644 = vmatprep.subr.bf16.mxu0 0
    %645 = vmatpush1.bf16.msra.mxu0 0
    %646 = vmatprep.subr.bf16.mxu0 0
    %647 = vmatpush1.bf16.msra.mxu0 0
    %648 = vmatprep.subr.bf16.mxu0 0
    %649 = vmatpush1.bf16.msra.mxu0 0
    %650 = vmatprep.subr.bf16.mxu0 0
    %651 = vmatpush1.bf16.msra.mxu0 0
    %652 = vmatprep.mubr.bf16.mxu0 0
    %653 = vmatmul.mubr.bf16.gmra.mrb[0].mxu0 %v618
    %v654 = vpop.f32.mrb[0].mxu0
    %v655 = vadd.f32 %v615, %v654
    %v656 = vpop.f32.mrb[0].mxu0
    %v657 = vadd.f32 %v194, %v656
    %v658 = vpop.f32.mrb[0].mxu0
    %v659 = vpop.f32.mrb[0].mxu0
    %660 = vdwg.mxu0
    %v661 = vxor.u32 %v655, 2147483648
    %v662 = vxor.u32 %v657, 2147483648
    %v663 = vmul.f32 %v661, 1.442695
    %v664 = vpow.pop %v663
    %v665 = vmul.f32 %v662, 1.442695
    %v666 = vpow.pop %v665
    %v667 = vadd.f32 %v664, 1.0
    %v668 = vadd.f32 %v666, 1.0
    %v669 = vrcp.pop %v667
    %v670 = vmul.f32 1.0, %v669
    %v671 = vrcp.pop %v668
    %v672 = vmul.f32 1.0, %v671
    %v673 = vtanh.pop %v655
    %v674 = vtanh.pop %v657
    %v675 = vmul.f32 %v670, %v580
    %677 = vrot.lane.b32.xlu0 %v673, 64
    %v678 = vpop.permute.xlu0 %677
    %v680 = vmul.f32 %v670, %v678
    %682 = vrot.lane.b32.xlu0 %v680, 32
    %v683 = vpop.permute.xlu0 %682
    %v685 = vadd.f32 %v675, %v683
    %v686 = vtanh.pop %v685
    %688 = vrot.lane.b32.xlu0 %v686, 64
    %v689 = vpop.permute.xlu0 %688
    %v691 = vmul.f32 %v670, %v689
    %v692 = vmul.f32 %v672, %v597
    %694 = vrot.lane.b32.xlu0 %v674, 64
    %v695 = vpop.permute.xlu0 %694
    %v697 = vmul.f32 %v672, %v695
    %699 = vrot.lane.b32.xlu0 %v697, 32
    %v700 = vpop.permute.xlu0 %699
    %v702 = vadd.f32 %v692, %v700
    %v703 = vtanh.pop %v702
    %705 = vrot.lane.b32.xlu0 %v703, 64
    %v706 = vpop.permute.xlu0 %705
    %v708 = vmul.f32 %v672, %v706
    %710 = vrot.lane.b32.xlu0 %v691, 32
    %v711 = vpop.permute.xlu0 %710
    %714 = vrot.lane.b32.xlu0 %v708, 64
    %v715 = vpop.permute.xlu0 %714
    %v717 = vsel %vm62, %v711, %v715
    %v718 = vpack.c.bf16 %v717, %v717
    %v719 = vrot.slane %v104, 4
    %v722 = vsel %vm197, %v718, 0
    %724 = vmatprep.subr.bf16.mxu0 %v177
    %725 = vmatpush1.bf16.msra.mxu0 %v176
    %726 = vmatprep.subr.bf16.mxu0 %v179
    %727 = vmatpush1.bf16.msra.mxu0 %v178
    %728 = vmatprep.subr.bf16.mxu0 %v181
    %729 = vmatpush1.bf16.msra.mxu0 %v180
    %730 = vmatprep.subr.bf16.mxu0 %v183
    %731 = vmatpush1.bf16.msra.mxu0 %v182
    %732 = vmatprep.subr.bf16.mxu0 0
    %733 = vmatpush1.bf16.msra.mxu0 0
    %734 = vmatprep.subr.bf16.mxu0 0
    %735 = vmatpush1.bf16.msra.mxu0 0
    %736 = vmatprep.subr.bf16.mxu0 0
    %737 = vmatpush1.bf16.msra.mxu0 0
    %738 = vmatprep.subr.bf16.mxu0 0
    %739 = vmatpush1.bf16.msra.mxu0 0
    %740 = vmatprep.subr.bf16.mxu0 0
    %741 = vmatpush1.bf16.msra.mxu0 0
    %742 = vmatprep.subr.bf16.mxu0 0
    %743 = vmatpush1.bf16.msra.mxu0 0
    %744 = vmatprep.subr.bf16.mxu0 0
    %745 = vmatpush1.bf16.msra.mxu0 0
    %746 = vmatprep.subr.bf16.mxu0 0
    %747 = vmatpush1.bf16.msra.mxu0 0
    %748 = vmatprep.subr.bf16.mxu0 0
    %749 = vmatpush1.bf16.msra.mxu0 0
    %750 = vmatprep.subr.bf16.mxu0 0
    %751 = vmatpush1.bf16.msra.mxu0 0
    %752 = vmatprep.subr.bf16.mxu0 0
    %753 = vmatpush1.bf16.msra.mxu0 0
    %754 = vmatprep.subr.bf16.mxu0 0
    %755 = vmatpush1.bf16.msra.mxu0 0
    %756 = vmatprep.mubr.bf16.mxu0 0
    %757 = vmatmul.mubr.bf16.gmra.mrb[0].mxu0 %v722
    %v758 = vpop.f32.mrb[0].mxu0
    %v759 = vadd.f32 %v719, %v758
    %v760 = vpop.f32.mrb[0].mxu0
    %v761 = vadd.f32 %v301, %v760
    %v762 = vpop.f32.mrb[0].mxu0
    %v763 = vpop.f32.mrb[0].mxu0
    %764 = vdwg.mxu0
    %v765 = vxor.u32 %v759, 2147483648
    %v766 = vxor.u32 %v761, 2147483648
    %v767 = vmul.f32 %v765, 1.442695
    %v768 = vpow.pop %v767
    %v769 = vmul.f32 %v766, 1.442695
    %v770 = vpow.pop %v769
    %v771 = vadd.f32 %v768, 1.0
    %v772 = vadd.f32 %v770, 1.0
    %v773 = vrcp.pop %v771
    %v774 = vmul.f32 1.0, %v773
    %v775 = vrcp.pop %v772
    %v776 = vmul.f32 1.0, %v775
    %v777 = vtanh.pop %v759
    %v778 = vtanh.pop %v761
    %v779 = vmul.f32 %v774, %v685
    %781 = vrot.lane.b32.xlu0 %v777, 64
    %v782 = vpop.permute.xlu0 %781
    %v784 = vmul.f32 %v774, %v782
    %786 = vrot.lane.b32.xlu0 %v784, 32
    %v787 = vpop.permute.xlu0 %786
    %v789 = vadd.f32 %v779, %v787
    %v790 = vtanh.pop %v789
    %792 = vrot.lane.b32.xlu0 %v790, 64
    %v793 = vpop.permute.xlu0 %792
    %v795 = vmul.f32 %v774, %v793
    %v796 = vmul.f32 %v776, %v702
    %798 = vrot.lane.b32.xlu0 %v778, 64
    %v799 = vpop.permute.xlu0 %798
    %v801 = vmul.f32 %v776, %v799
    %803 = vrot.lane.b32.xlu0 %v801, 32
    %v804 = vpop.permute.xlu0 %803
    %v806 = vadd.f32 %v796, %v804
    %v807 = vtanh.pop %v806
    %809 = vrot.lane.b32.xlu0 %v807, 64
    %v810 = vpop.permute.xlu0 %809
    %v812 = vmul.f32 %v776, %v810
    %814 = vrot.lane.b32.xlu0 %v795, 32
    %v815 = vpop.permute.xlu0 %814
    %818 = vrot.lane.b32.xlu0 %v812, 64
    %v819 = vpop.permute.xlu0 %818
    %v821 = vsel %vm62, %v815, %v819
    %v822 = vpack.c.bf16 %v821, %v821
    %v823 = vrot.slane %v104, 6
    %v826 = vsel %vm197, %v822, 0
    %828 = vmatprep.subr.bf16.mxu0 %v177
    %829 = vmatpush1.bf16.msra.mxu0 %v176
    %830 = vmatprep.subr.bf16.mxu0 %v179
    %831 = vmatpush1.bf16.msra.mxu0 %v178
    %832 = vmatprep.subr.bf16.mxu0 %v181
    %833 = vmatpush1.bf16.msra.mxu0 %v180
    %834 = vmatprep.subr.bf16.mxu0 %v183
    %835 = vmatpush1.bf16.msra.mxu0 %v182
    %836 = vmatprep.subr.bf16.mxu0 0
    %837 = vmatpush1.bf16.msra.mxu0 0
    %838 = vmatprep.subr.bf16.mxu0 0
    %839 = vmatpush1.bf16.msra.mxu0 0
    %840 = vmatprep.subr.bf16.mxu0 0
    %841 = vmatpush1.bf16.msra.mxu0 0
    %842 = vmatprep.subr.bf16.mxu0 0
    %843 = vmatpush1.bf16.msra.mxu0 0
    %844 = vmatprep.subr.bf16.mxu0 0
    %845 = vmatpush1.bf16.msra.mxu0 0
    %846 = vmatprep.subr.bf16.mxu0 0
    %847 = vmatpush1.bf16.msra.mxu0 0
    %848 = vmatprep.subr.bf16.mxu0 0
    %849 = vmatpush1.bf16.msra.mxu0 0
    %850 = vmatprep.subr.bf16.mxu0 0
    %851 = vmatpush1.bf16.msra.mxu0 0
    %852 = vmatprep.subr.bf16.mxu0 0
    %853 = vmatpush1.bf16.msra.mxu0 0
    %854 = vmatprep.subr.bf16.mxu0 0
    %855 = vmatpush1.bf16.msra.mxu0 0
    %856 = vmatprep.subr.bf16.mxu0 0
    %857 = vmatpush1.bf16.msra.mxu0 0
    %858 = vmatprep.subr.bf16.mxu0 0
    %859 = vmatpush1.bf16.msra.mxu0 0
    %860 = vmatprep.mubr.bf16.mxu0 0
    %861 = vmatmul.mubr.bf16.gmra.mrb[0].mxu0 %v826
    %v862 = vpop.f32.mrb[0].mxu0
    %v863 = vadd.f32 %v823, %v862
    %v864 = vpop.f32.mrb[0].mxu0
    %v865 = vadd.f32 %v407, %v864
    %v866 = vpop.f32.mrb[0].mxu0
    %v867 = vpop.f32.mrb[0].mxu0
    %868 = vdwg.mxu0
    %v869 = vxor.u32 %v863, 2147483648
    %v870 = vxor.u32 %v865, 2147483648
    %v871 = vmul.f32 %v869, 1.442695
    %v872 = vpow.pop %v871
    %v873 = vmul.f32 %v870, 1.442695
    %v874 = vpow.pop %v873
    %v875 = vadd.f32 %v872, 1.0
    %v876 = vadd.f32 %v874, 1.0
    %v877 = vrcp.pop %v875
    %v878 = vmul.f32 1.0, %v877
    %v879 = vrcp.pop %v876
    %v880 = vmul.f32 1.0, %v879
    %v881 = vtanh.pop %v863
    %v882 = vtanh.pop %v865
    %v883 = vmul.f32 %v878, %v789
    %885 = vrot.lane.b32.xlu0 %v881, 64
    %v886 = vpop.permute.xlu0 %885
    %v888 = vmul.f32 %v878, %v886
    %890 = vrot.lane.b32.xlu0 %v888, 32
    %v891 = vpop.permute.xlu0 %890
    %v893 = vadd.f32 %v883, %v891
    %v894 = vtanh.pop %v893
    %896 = vrot.lane.b32.xlu0 %v894, 64
    %v897 = vpop.permute.xlu0 %896
    %v899 = vmul.f32 %v878, %v897
    %v900 = vmul.f32 %v880, %v806
    %902 = vrot.lane.b32.xlu0 %v882, 64
    %v903 = vpop.permute.xlu0 %902
    %v905 = vmul.f32 %v880, %v903
    %907 = vrot.lane.b32.xlu0 %v905, 32
    %v908 = vpop.permute.xlu0 %907
    %v910 = vadd.f32 %v900, %v908
    %v911 = vtanh.pop %v910
    %913 = vrot.lane.b32.xlu0 %v911, 64
    %v914 = vpop.permute.xlu0 %913
    %v916 = vmul.f32 %v880, %v914
    %918 = vrot.lane.b32.xlu0 %v899, 32
    %v919 = vpop.permute.xlu0 %918
    %922 = vrot.lane.b32.xlu0 %v916, 64
    %v923 = vpop.permute.xlu0 %922
    %v925 = vsel %vm62, %v919, %v923
    %v926 = vpack.c.bf16 %v925, %v925
    %v928 = vsel %vm197, %v926, 0
    %930 = vmatprep.subr.bf16.mxu0 %v177
    %931 = vmatpush1.bf16.msra.mxu0 %v176
    %932 = vmatprep.subr.bf16.mxu0 %v179
    %933 = vmatpush1.bf16.msra.mxu0 %v178
    %934 = vmatprep.subr.bf16.mxu0 %v181
    %935 = vmatpush1.bf16.msra.mxu0 %v180
    %936 = vmatprep.subr.bf16.mxu0 %v183
    %937 = vmatpush1.bf16.msra.mxu0 %v182
    %938 = vmatprep.subr.bf16.mxu0 0
    %939 = vmatpush1.bf16.msra.mxu0 0
    %940 = vmatprep.subr.bf16.mxu0 0
    %941 = vmatpush1.bf16.msra.mxu0 0
    %942 = vmatprep.subr.bf16.mxu0 0
    %943 = vmatpush1.bf16.msra.mxu0 0
    %944 = vmatprep.subr.bf16.mxu0 0
    %945 = vmatpush1.bf16.msra.mxu0 0
    %946 = vmatprep.subr.bf16.mxu0 0
    %947 = vmatpush1.bf16.msra.mxu0 0
    %948 = vmatprep.subr.bf16.mxu0 0
    %949 = vmatpush1.bf16.msra.mxu0 0
    %950 = vmatprep.subr.bf16.mxu0 0
    %951 = vmatpush1.bf16.msra.mxu0 0
    %952 = vmatprep.subr.bf16.mxu0 0
    %953 = vmatpush1.bf16.msra.mxu0 0
    %954 = vmatprep.subr.bf16.mxu0 0
    %955 = vmatpush1.bf16.msra.mxu0 0
    %956 = vmatprep.subr.bf16.mxu0 0
    %957 = vmatpush1.bf16.msra.mxu0 0
    %958 = vmatprep.subr.bf16.mxu0 0
    %959 = vmatpush1.bf16.msra.mxu0 0
    %960 = vmatprep.subr.bf16.mxu0 0
    %961 = vmatpush1.bf16.msra.mxu0 0
    %962 = vmatprep.mubr.bf16.mxu0 0
    %963 = vmatmul.mubr.bf16.gmra.mrb[0].mxu0 %v928
    %v964 = vpop.f32.mrb[0].mxu0
    %v965 = vpop.f32.mrb[0].mxu0
    %v966 = vadd.f32 0.0, %v965
    %v967 = vpop.f32.mrb[0].mxu0
    %v968 = vpop.f32.mrb[0].mxu0
    %969 = vdwg.mxu0
    %v970 = vadd.f32 %v966, %v112
    %v971 = vxor.u32 %v970, 2147483648
    %v972 = vmul.f32 %v971, 1.442695
    %v973 = vpow.pop %v972
    %v974 = vadd.f32 %v973, 1.0
    %v975 = vrcp.pop %v974
    %v976 = vmul.f32 1.0, %v975
    %v977 = vtanh.pop %v970
    %v978 = vmul.f32 %v976, %v910
    %980 = vrot.lane.b32.xlu0 %v977, 64
    %v981 = vpop.permute.xlu0 %980
    %v983 = vmul.f32 %v976, %v981
    %985 = vrot.lane.b32.xlu0 %v983, 32
    %v986 = vpop.permute.xlu0 %985
    %v988 = vadd.f32 %v978, %v986
    %v989 = vtanh.pop %v988
    %991 = vrot.lane.b32.xlu0 %v989, 64
    %v992 = vpop.permute.xlu0 %991
    %v994 = vmul.f32 %v976, %v992
    %996 = vrot.lane.b32.xlu0 %v994, 32
    %v997 = vpop.permute.xlu0 %996
    %vm999 = vcmask 254976
    %1000 = vst.msk [vmem:[#allocation5] sm:$0x3] %vm999, %v997
    // Predicated region
    $region26: #{rnn_forward.1} parent=1 // pred_check
      _
    $region27: #{rnn_forward.1} parent=1 // pred_check_branch
      %1002 = sbr.rel (0) target = $region29
    $region28: #{rnn_forward.1} parent=1 // pred_region
      %s1004 = ssub.s32 32, 32
      %1005 = vsyncadd [#allocation4], %s1004
      %s1007 = sshll.u32 [#allocation5], 4
      %s1008 = int_to_ptr.vmem [resolvable:$true] %s1007
      %1010 = dma.vmem_to_hbm [thread:$0]  %s1008, 32, %s5, [#allocation4]
    $region29: #{rnn_forward.1} parent=1 // pred_fallthru
      _
    // Predicated region
    $region30: #{rnn_forward.1} parent=1 // pred_check
      _
    $region31: #{rnn_forward.1} parent=1 // pred_check_branch
      %1012 = sbr.rel (0) target = $region33
    $region32: #{rnn_forward.1} parent=1 // pred_region
      %1013 = dma.done [#allocation4], 32
    $region33: #{rnn_forward.1} parent=1 // pred_fallthru
      _
    %1014 = vsyncpa [#allocation3], 1
    %1015 = vsyncpa [#allocation4], 1

</llo_original>
